<compile_context>
chip_gen: v5e
topology: v5e:2x2
jax: 0.10.0
libtpu: 0.0.40
codegen_flags: <defaults>
</compile_context>

<pallas_src>
import jax
import jax.numpy as jnp
from jax.experimental import pallas as pl
from jax.experimental.pallas import tpu as pltpu


def _proj_block_kernel(x_ref, w1_ref, b1_ref, w2_ref, b2_ref, o_ref):
    # x_ref : (1, C, TL)   one (batch, L-tile) block, L on lanes
    # w1_ref: (C, mid, 1)  mlp1 weight, one (mid, 1) column per input channel
    # b1_ref: (mid, 1)
    # w2_ref: (mid, 1)
    # b2_ref: (1,)         scalar bias in SMEM
    # o_ref : (1, 1, TL)   lane-dense output row
    C = x_ref.shape[1]
    x = x_ref[0]                                            # (C, TL)

    # mlp1: 1x1 conv == per-channel outer-product accumulate on the VPU
    h = w1_ref[0] * x[0:1, :]                               # (mid,1)*(1,TL) -> (mid, TL)
    for c in range(1, C):                                   # unrolled, C is tiny
        h = h + w1_ref[c] * x[c:c + 1, :]
    h = h + b1_ref[...]                                     # broadcast (mid,1) over lanes

    # exact GELU (PyTorch nn.GELU() default: erf form)
    g = 0.5 * h * (1.0 + jax.lax.erf(h * 0.7071067811865476))

    # mlp2: weighted sum over mid channels (cross-sublane reduce) + scalar bias from SMEM
    y = jnp.sum(g * w2_ref[...], axis=0, keepdims=True) + b2_ref[0]   # (1, TL)

    o_ref[0] = y.astype(o_ref.dtype)


def projection_block_forward(x, w1, b1, w2, b2, max_tl=512):
    """x: (B, width, L) NCL as in PyTorch.  Returns (B, L, 1) (= permute(0,2,1) of conv out)."""
    B, C, L = x.shape
    mid = w1.shape[0]                       # = 2 * width

    # Lane tile: largest multiple of 128 dividing L (capped), else a single full-L tile.
    TL = L
    if L % 128 == 0:
        for cand in range(max_tl, 0, -128):
            if L % cand == 0:
                TL = cand
                break
    nT = L // TL

    # Weight layout prep (tiny, plain JAX glue):
    #   w1 -> (C, mid, 1) so w1_ref[c] is a ready-to-broadcast (mid, 1) column
    w1_k = jnp.transpose(w1[:, :, 0]).astype(jnp.float32)[:, :, None]   # (C, mid, 1)
    b1_k = b1.astype(jnp.float32).reshape(mid, 1)                       # (mid, 1)
    w2_k = w2[0, :, 0].astype(jnp.float32).reshape(mid, 1)              # (mid, 1)
    b2_k = b2.astype(jnp.float32).reshape(1)                            # (1,) -> SMEM scalar

    itemsize = jnp.dtype(x.dtype).itemsize
    cost = pl.CostEstimate(
        flops=2 * B * L * mid * (C + 1),
        transcendentals=B * L * mid,
        bytes_accessed=(B * L * C * itemsize            # x
                        + B * L * itemsize              # output
                        + int(w1_k.size + b1_k.size + w2_k.size + b2_k.size) * 4),
    )

    out = pl.pallas_call(
        _proj_block_kernel,
        out_shape=jax.ShapeDtypeStruct((B, 1, L), x.dtype),
        grid=(B, nT),
        in_specs=[
            pl.BlockSpec((1, C, TL), lambda b, t: (b, 0, t)),       # x tile, L on lanes
            pl.BlockSpec((C, mid, 1), lambda b, t: (0, 0, 0)),      # w1 (loaded once)
            pl.BlockSpec((mid, 1), lambda b, t: (0, 0)),            # b1
            pl.BlockSpec((mid, 1), lambda b, t: (0, 0)),            # w2
            pl.BlockSpec(memory_space=pltpu.MemorySpace.SMEM),      # b2 scalar in SMEM
        ],
        out_specs=pl.BlockSpec((1, 1, TL), lambda b, t: (b, 0, t)),
        compiler_params=pltpu.CompilerParams(
            dimension_semantics=("parallel", "parallel")),
        cost_estimate=cost,
    )(x, w1_k, b1_k, w2_k, b2_k)

    # (B, 1, L) -> (B, L, 1): free layout plumbing (middle dim is 1)
    return out.reshape(B, L, 1)


def _reference_forward(x, w1, b1, w2, b2):
    # pure-JAX reference of projection_block.forward (PyTorch semantics)
    h = jnp.einsum('bcl,mc->bml', x, w1[:, :, 0]) + b1[None, :, None]
    h = jax.nn.gelu(h, approximate=False)
    y = jnp.einsum('bml,om->bol', h, w2[:, :, 0]) + b2[None, :, None]
    return jnp.transpose(y, (0, 2, 1))          # (B, L, 1)


if __name__ == "__main__":
    width = 8          # in_channels
    mid = 2 * width    # mid_channels (width * 2)
    B = 2

    key = jax.random.PRNGKey(0)
    k_x, k_w1, k_b1, k_w2, k_b2 = jax.random.split(key, 5)

    # Conv1d weight shapes: (out_channels, in_channels, kernel_size=1)
    w1 = jax.random.normal(k_w1, (mid, width, 1), dtype=jnp.float32) * 0.1
    b1 = jax.random.normal(k_b1, (mid,), dtype=jnp.float32) * 0.1
    w2 = jax.random.normal(k_w2, (1, mid, 1), dtype=jnp.float32) * 0.1
    b2 = jax.random.normal(k_b2, (1,), dtype=jnp.float32) * 0.1

    # L=1024 exercises the tiled path (TL=512, grid=(B, 2)); L=48 the single-tile fallback.
    for L in (1024, 48):
        x = jax.random.normal(k_x, (B, width, L), dtype=jnp.float32)
        out = jax.block_until_ready(projection_block_forward(x, w1, b1, w2, b2))
        ref = _reference_forward(x, w1, b1, w2, b2)
        assert out.shape == (B, L, 1), out.shape
        assert jnp.allclose(out, ref, atol=1e-5, rtol=1e-5), f"mismatch vs reference at L={L}"

    print("KERNEL_OK")
</pallas_src>

<mosaic_0001>
module attributes {stable_mosaic.version = 11 : i64} {
  func.func @_proj_block_kernel(%arg0: i32, %arg1: i32, %arg2: memref<1x8x512xf32, #tpu.memory_space<vmem>>, %arg3: memref<8x16x1xf32, #tpu.memory_space<vmem>>, %arg4: memref<16x1xf32, #tpu.memory_space<vmem>>, %arg5: memref<16x1xf32, #tpu.memory_space<vmem>>, %arg6: memref<1xf32, #tpu.memory_space<smem>>, %arg7: memref<1x1x512xf32, #tpu.memory_space<vmem>>) attributes {dimension_semantics = [#tpu.dimension_semantics<parallel>, #tpu.dimension_semantics<parallel>], iteration_bounds = array<i64: 2, 2>, scalar_prefetch = 0 : i64, scratch_operands = 0 : i64, tpu.core_type = #tpu.core_type<tc>, window_params = [{transform_indices = @transform_0, window_bounds = array<i64: 1, 8, 512>}, {pipeline_mode = #tpu.pipeline_mode<synchronous>, transform_indices = @transform_1, window_bounds = array<i64: 8, 16, 1>}, {pipeline_mode = #tpu.pipeline_mode<synchronous>, transform_indices = @transform_2, window_bounds = array<i64: 16, 1>}, {pipeline_mode = #tpu.pipeline_mode<synchronous>, transform_indices = @transform_3, window_bounds = array<i64: 16, 1>}, {transform_indices = @transform_4, window_bounds = array<i64: 1>}, {transform_indices = @transform_5, window_bounds = array<i64: 1, 1, 512>}]} {
    %c0 = arith.constant 0 : index
    %c0_0 = arith.constant 0 : index
    %c0_1 = arith.constant 0 : index
    %0 = vector.load %arg2[%c0, %c0_0, %c0_1] : memref<1x8x512xf32, #tpu.memory_space<vmem>>, vector<1x8x512xf32>
    %1 = vector.shape_cast %0 : vector<1x8x512xf32> to vector<8x512xf32>
    %c0_2 = arith.constant 0 : index
    %c0_3 = arith.constant 0 : index
    %c0_4 = arith.constant 0 : index
    %2 = vector.load %arg3[%c0_2, %c0_3, %c0_4] : memref<8x16x1xf32, #tpu.memory_space<vmem>>, vector<1x16x1xf32>
    %3 = vector.shape_cast %2 : vector<1x16x1xf32> to vector<16x1xf32>
    %4 = vector.extract_strided_slice %1 {offsets = [0, 0], sizes = [1, 512], strides = [1, 1]} : vector<8x512xf32> to vector<1x512xf32>
    %5 = vector.broadcast %3 : vector<16x1xf32> to vector<16x512xf32>
    %6 = vector.broadcast %4 : vector<1x512xf32> to vector<16x512xf32>
    %7 = arith.mulf %5, %6 : vector<16x512xf32>
    %c1 = arith.constant 1 : index
    %c0_5 = arith.constant 0 : index
    %c0_6 = arith.constant 0 : index
    %8 = vector.load %arg3[%c1, %c0_5, %c0_6] : memref<8x16x1xf32, #tpu.memory_space<vmem>>, vector<1x16x1xf32>
    %9 = vector.shape_cast %8 : vector<1x16x1xf32> to vector<16x1xf32>
    %10 = vector.extract_strided_slice %1 {offsets = [1, 0], sizes = [1, 512], strides = [1, 1]} : vector<8x512xf32> to vector<1x512xf32>
    %11 = vector.broadcast %9 : vector<16x1xf32> to vector<16x512xf32>
    %12 = vector.broadcast %10 : vector<1x512xf32> to vector<16x512xf32>
    %13 = arith.mulf %11, %12 : vector<16x512xf32>
    %14 = arith.addf %7, %13 : vector<16x512xf32>
    %c2 = arith.constant 2 : index
    %c0_7 = arith.constant 0 : index
    %c0_8 = arith.constant 0 : index
    %15 = vector.load %arg3[%c2, %c0_7, %c0_8] : memref<8x16x1xf32, #tpu.memory_space<vmem>>, vector<1x16x1xf32>
    %16 = vector.shape_cast %15 : vector<1x16x1xf32> to vector<16x1xf32>
    %17 = vector.extract_strided_slice %1 {offsets = [2, 0], sizes = [1, 512], strides = [1, 1]} : vector<8x512xf32> to vector<1x512xf32>
    %18 = vector.broadcast %16 : vector<16x1xf32> to vector<16x512xf32>
    %19 = vector.broadcast %17 : vector<1x512xf32> to vector<16x512xf32>
    %20 = arith.mulf %18, %19 : vector<16x512xf32>
    %21 = arith.addf %14, %20 : vector<16x512xf32>
    %c3 = arith.constant 3 : index
    %c0_9 = arith.constant 0 : index
    %c0_10 = arith.constant 0 : index
    %22 = vector.load %arg3[%c3, %c0_9, %c0_10] : memref<8x16x1xf32, #tpu.memory_space<vmem>>, vector<1x16x1xf32>
    %23 = vector.shape_cast %22 : vector<1x16x1xf32> to vector<16x1xf32>
    %24 = vector.extract_strided_slice %1 {offsets = [3, 0], sizes = [1, 512], strides = [1, 1]} : vector<8x512xf32> to vector<1x512xf32>
    %25 = vector.broadcast %23 : vector<16x1xf32> to vector<16x512xf32>
    %26 = vector.broadcast %24 : vector<1x512xf32> to vector<16x512xf32>
    %27 = arith.mulf %25, %26 : vector<16x512xf32>
    %28 = arith.addf %21, %27 : vector<16x512xf32>
    %c4 = arith.constant 4 : index
    %c0_11 = arith.constant 0 : index
    %c0_12 = arith.constant 0 : index
    %29 = vector.load %arg3[%c4, %c0_11, %c0_12] : memref<8x16x1xf32, #tpu.memory_space<vmem>>, vector<1x16x1xf32>
    %30 = vector.shape_cast %29 : vector<1x16x1xf32> to vector<16x1xf32>
    %31 = vector.extract_strided_slice %1 {offsets = [4, 0], sizes = [1, 512], strides = [1, 1]} : vector<8x512xf32> to vector<1x512xf32>
    %32 = vector.broadcast %30 : vector<16x1xf32> to vector<16x512xf32>
    %33 = vector.broadcast %31 : vector<1x512xf32> to vector<16x512xf32>
    %34 = arith.mulf %32, %33 : vector<16x512xf32>
    %35 = arith.addf %28, %34 : vector<16x512xf32>
    %c5 = arith.constant 5 : index
    %c0_13 = arith.constant 0 : index
    %c0_14 = arith.constant 0 : index
    %36 = vector.load %arg3[%c5, %c0_13, %c0_14] : memref<8x16x1xf32, #tpu.memory_space<vmem>>, vector<1x16x1xf32>
    %37 = vector.shape_cast %36 : vector<1x16x1xf32> to vector<16x1xf32>
    %38 = vector.extract_strided_slice %1 {offsets = [5, 0], sizes = [1, 512], strides = [1, 1]} : vector<8x512xf32> to vector<1x512xf32>
    %39 = vector.broadcast %37 : vector<16x1xf32> to vector<16x512xf32>
    %40 = vector.broadcast %38 : vector<1x512xf32> to vector<16x512xf32>
    %41 = arith.mulf %39, %40 : vector<16x512xf32>
    %42 = arith.addf %35, %41 : vector<16x512xf32>
    %c6 = arith.constant 6 : index
    %c0_15 = arith.constant 0 : index
    %c0_16 = arith.constant 0 : index
    %43 = vector.load %arg3[%c6, %c0_15, %c0_16] : memref<8x16x1xf32, #tpu.memory_space<vmem>>, vector<1x16x1xf32>
    %44 = vector.shape_cast %43 : vector<1x16x1xf32> to vector<16x1xf32>
    %45 = vector.extract_strided_slice %1 {offsets = [6, 0], sizes = [1, 512], strides = [1, 1]} : vector<8x512xf32> to vector<1x512xf32>
    %46 = vector.broadcast %44 : vector<16x1xf32> to vector<16x512xf32>
    %47 = vector.broadcast %45 : vector<1x512xf32> to vector<16x512xf32>
    %48 = arith.mulf %46, %47 : vector<16x512xf32>
    %49 = arith.addf %42, %48 : vector<16x512xf32>
    %c7 = arith.constant 7 : index
    %c0_17 = arith.constant 0 : index
    %c0_18 = arith.constant 0 : index
    %50 = vector.load %arg3[%c7, %c0_17, %c0_18] : memref<8x16x1xf32, #tpu.memory_space<vmem>>, vector<1x16x1xf32>
    %51 = vector.shape_cast %50 : vector<1x16x1xf32> to vector<16x1xf32>
    %52 = vector.extract_strided_slice %1 {offsets = [7, 0], sizes = [1, 512], strides = [1, 1]} : vector<8x512xf32> to vector<1x512xf32>
    %53 = vector.broadcast %51 : vector<16x1xf32> to vector<16x512xf32>
    %54 = vector.broadcast %52 : vector<1x512xf32> to vector<16x512xf32>
    %55 = arith.mulf %53, %54 : vector<16x512xf32>
    %56 = arith.addf %49, %55 : vector<16x512xf32>
    %c0_19 = arith.constant 0 : index
    %c0_20 = arith.constant 0 : index
    %57 = vector.load %arg4[%c0_19, %c0_20] : memref<16x1xf32, #tpu.memory_space<vmem>>, vector<16x1xf32>
    %58 = vector.broadcast %57 : vector<16x1xf32> to vector<16x512xf32>
    %59 = arith.addf %56, %58 : vector<16x512xf32>
    %cst = arith.constant 5.000000e-01 : f32
    %60 = vector.broadcast %cst : f32 to vector<16x512xf32>
    %61 = arith.mulf %60, %59 : vector<16x512xf32>
    %cst_21 = arith.constant 0.707106769 : f32
    %62 = vector.broadcast %cst_21 : f32 to vector<16x512xf32>
    %63 = arith.mulf %59, %62 : vector<16x512xf32>
    %64 = math.erf %63 : vector<16x512xf32>
    %cst_22 = arith.constant 1.000000e+00 : f32
    %65 = vector.broadcast %cst_22 : f32 to vector<16x512xf32>
    %66 = arith.addf %65, %64 : vector<16x512xf32>
    %67 = arith.mulf %61, %66 : vector<16x512xf32>
    %c0_23 = arith.constant 0 : index
    %c0_24 = arith.constant 0 : index
    %68 = vector.load %arg5[%c0_23, %c0_24] : memref<16x1xf32, #tpu.memory_space<vmem>>, vector<16x1xf32>
    %69 = vector.broadcast %68 : vector<16x1xf32> to vector<16x512xf32>
    %70 = arith.mulf %67, %69 : vector<16x512xf32>
    %cst_25 = arith.constant dense<0.000000e+00> : vector<512xf32>
    %71 = vector.multi_reduction <add>, %70, %cst_25 [0] : vector<16x512xf32> to vector<512xf32>
    %72 = vector.shape_cast %71 : vector<512xf32> to vector<1x512xf32>
    %c0_26 = arith.constant 0 : index
    %73 = memref.load %arg6[%c0_26] : memref<1xf32, #tpu.memory_space<smem>>
    %74 = vector.broadcast %73 : f32 to vector<1x512xf32>
    %75 = arith.addf %72, %74 : vector<1x512xf32>
    %c0_27 = arith.constant 0 : index
    %c0_28 = arith.constant 0 : index
    %c0_29 = arith.constant 0 : index
    %76 = vector.load %arg7[%c0_27, %c0_28, %c0_29] : memref<1x1x512xf32, #tpu.memory_space<vmem>>, vector<1x1x512xf32>
    %77 = vector.shape_cast %76 : vector<1x1x512xf32> to vector<1x512xf32>
    %78 = vector.shape_cast %75 : vector<1x512xf32> to vector<1x1x512xf32>
    tpu.vector_store %arg7[%c0_27, %c0_28, %c0_29], %78 {strides = array<i32>} : memref<1x1x512xf32, #tpu.memory_space<vmem>>, vector<1x1x512xf32>,
    return
  }
  func.func @transform_0(%arg0: i32, %arg1: i32) -> (i32, i32, i32) {
    %c0_i32 = arith.constant 0 : i32
    %c0_i32_0 = arith.constant 0 : i32
    return %arg0, %c0_i32, %arg1 : i32, i32, i32
  }
  func.func @transform_1(%arg0: i32, %arg1: i32) -> (i32, i32, i32) {
    %c0_i32 = arith.constant 0 : i32
    %c0_i32_0 = arith.constant 0 : i32
    %c0_i32_1 = arith.constant 0 : i32
    %c0_i32_2 = arith.constant 0 : i32
    return %c0_i32, %c0_i32_0, %c0_i32_1 : i32, i32, i32
  }
  func.func @transform_2(%arg0: i32, %arg1: i32) -> (i32, i32) {
    %c0_i32 = arith.constant 0 : i32
    %c0_i32_0 = arith.constant 0 : i32
    %c0_i32_1 = arith.constant 0 : i32
    return %c0_i32, %c0_i32_0 : i32, i32
  }
  func.func @transform_3(%arg0: i32, %arg1: i32) -> (i32, i32) {
    %c0_i32 = arith.constant 0 : i32
    %c0_i32_0 = arith.constant 0 : i32
    %c0_i32_1 = arith.constant 0 : i32
    return %c0_i32, %c0_i32_0 : i32, i32
  }
  func.func @transform_4(%arg0: i32, %arg1: i32) -> i32 {
    %c0_i32 = arith.constant 0 : i32
    %c0_i32_0 = arith.constant 0 : i32
    return %c0_i32 : i32
  }
  func.func @transform_5(%arg0: i32, %arg1: i32) -> (i32, i32, i32) {
    %c0_i32 = arith.constant 0 : i32
    %c0_i32_0 = arith.constant 0 : i32
    return %arg0, %c0_i32, %arg1 : i32, i32, i32
  }
}

</mosaic_0001>

<llo_original>
// kernel: tpu_custom_call.1
$region0: #{tpu_custom_call.1}
  #allocation0 [shape = 'u32[]', space=smem, size = 0x4, offset = 0x4, fixed_abs, tag = 'smem constant byte address 0x4 - core index']
  #allocation1 [shape = 'u32[72,128]{1,0:T(1,128)}', space=vmem, size = 0x9000, scoped, tag = 'internal scratch']
  #allocation2 [shape = 'f32[1]{0:T(128)S(6)}', space=smem, size = 0x200, scoped, tag = 'scoped memory for tpu_custom_call.1']
  %s0 = inlined_call_operand.vmem [shape: f32[2,8,1024], index: 0, kind: input, shape index: {}]
  %s1 = inlined_call_operand.vmem [shape: f32[8,16,1], index: 1, kind: input, shape index: {}]
  %s2 = inlined_call_operand.vmem [shape: f32[16,1], index: 2, kind: input, shape index: {}]
  %s3 = inlined_call_operand.vmem [shape: f32[16,1], index: 3, kind: input, shape index: {}]
  %s4 = inlined_call_operand.<no memory space> [shape: f32[1], index: 4, kind: input, shape index: {}]
  %s5 = inlined_call_operand.hbm [shape: f32[2,1,1024], index: 5, kind: output, shape index: {}]
  %s6 = sld [smem:[#allocation0]]
  $region53: #{tpu_custom_call.1} parent=0
    _
  %s8 = ssub.s32 1, %s6
  %s9 = scalar_select 0, %s8, %s6
  %10 = sst [smem:[#allocation2]] %s4
  $region1: #{tpu_custom_call.1} parent=0
    #allocation3 [shape = 'u8[4096]{0}', space=vmem, size = 0x1000, scoped, tag = 'output window, operand 0']
    #allocation4 [shape = 's32[2]{0}', space=sflag, size = 0x8, scoped, tag = 'scoped memory for tpu_custom_call.1']
    %11 = vsyncpa [#allocation4], 0
    %s12 = scalar_lea.sflag [#allocation4], 1
    %13 = vsyncpa %s12, 0
    loop: start=0, step=1, limit=6
    $region2: #{tpu_custom_call.1} parent=1 // loop_pre_header
      _
    $region3: #{tpu_custom_call.1} parent=1 // loop_header
      %s15 = sphi 0, %s19
      %p16 = scmp.ge.s32.totalorder %s15, 6
      %s22 = sphi 0, %s34
      %s23 = sphi 0, %s30
      %s24 = sphi 0, %s22
      %s25 = sphi 0, %s23
      %s26 = sphi 0, %s24
      %s27 = sphi 0, %s25
      %s39 = sphi 0, %s41
      %s42 = sphi 0, %s39
      %s43 = sphi 0, %s42
      %s59 = sphi 0, %s43
      %s63 = sphi 0, %s63
      %s65 = sphi 0, %s63
      %s66 = sphi 0, %s65
      %s80 = sphi 0, %s66
      %s84 = sphi 0, %s84
      %s86 = sphi 0, %s84
      %s87 = sphi 0, %s86
      %s101 = sphi 0, %s87
      %s105 = sphi 0, %s105
      %s107 = sphi 0, %s105
      %s108 = sphi 0, %s107
      %s122 = sphi 0, %s108
      %s126 = sphi 0, %s126
      %s128 = sphi 0, %s126
      %s129 = sphi 0, %s128
      %s143 = sphi 0, %s129
      %s151 = sphi 0, %s153
      %s154 = sphi 0, %s151
      %s155 = sphi 0, %s154
      %s171 = sphi 0, %s155
    $region4: #{tpu_custom_call.1} parent=1 // loop_header_branch
      %18 = sbr.rel (%p16) target = $region8
    $region5: #{tpu_custom_call.1} parent=1 // loop_body
      %s20 = ssub.s32 %s15, 1
      %s21 = ssub.s32 %s15, 2
      %s28 = sadd.s32 1, %s23
      %p29 = scmp.ge.s32.totalorder %s28, 2
      %s30 = scalar_select %p29, 0, %s28
      %s31 = sadd.s32 1, %s22
      %s32 = scalar_select %p29, %s31, %s22
      %p33 = scmp.ge.s32.totalorder %s32, 2
      %s34 = scalar_select %p33, 0, %s32
      %s35 = ssub.s32 %s22, %s34
      %s36 = ssub.s32 %s23, %s30
      %s37 = sor.u32 %s35, %s36
      %p38 = scmp.eq.s32.totalorder %s37, 0
      %s40 = sadd.s32 %s39, 1
      %s41 = scalar_select %p38, %s39, %s40
      %p44 = pneg %p38
      %p45 = scmp.eq.s32.totalorder %s15, 3
      %p46 = por %p44, %p45
      %p47 = scmp.ne.s32.totalorder %s39, %s42
      %p48 = scmp.eq.s32.totalorder %s15, 0
      %p49 = por %p47, %p48
      %p50 = scmp.ne.s32.totalorder %s39, %s42
      %p51 = scmp.eq.s32.totalorder %s20, 3
      %p52 = por %p50, %p51
      %p53 = scmp.ne.s32.totalorder %s42, %s43
      %p54 = scmp.eq.s32.totalorder %s20, 0
      %p55 = por %p53, %p54
      %p56 = scmp.ne.s32.totalorder %s42, %s43
      %p57 = scmp.eq.s32.totalorder %s21, 3
      %p58 = por %p56, %p57
      %p60 = scmp.ne.s32.totalorder %s43, %s59
      %p61 = scmp.eq.s32.totalorder %s21, 0
      %p62 = por %p60, %p61
      %s64 = sadd.s32 %s63, 1
      %p67 = scmp.eq.s32.totalorder %s15, 3
      %p68 = scmp.ne.s32.totalorder %s63, %s65
      %p69 = scmp.eq.s32.totalorder %s15, 0
      %p70 = por %p68, %p69
      %p71 = scmp.ne.s32.totalorder %s63, %s65
      %p72 = scmp.eq.s32.totalorder %s20, 3
      %p73 = por %p71, %p72
      %p74 = scmp.ne.s32.totalorder %s65, %s66
      %p75 = scmp.eq.s32.totalorder %s20, 0
      %p76 = por %p74, %p75
      %p77 = scmp.ne.s32.totalorder %s65, %s66
      %p78 = scmp.eq.s32.totalorder %s21, 3
      %p79 = por %p77, %p78
      %p81 = scmp.ne.s32.totalorder %s66, %s80
      %p82 = scmp.eq.s32.totalorder %s21, 0
      %p83 = por %p81, %p82
      %s85 = sadd.s32 %s84, 1
      %p88 = scmp.eq.s32.totalorder %s15, 3
      %p89 = scmp.ne.s32.totalorder %s84, %s86
      %p90 = scmp.eq.s32.totalorder %s15, 0
      %p91 = por %p89, %p90
      %p92 = scmp.ne.s32.totalorder %s84, %s86
      %p93 = scmp.eq.s32.totalorder %s20, 3
      %p94 = por %p92, %p93
      %p95 = scmp.ne.s32.totalorder %s86, %s87
      %p96 = scmp.eq.s32.totalorder %s20, 0
      %p97 = por %p95, %p96
      %p98 = scmp.ne.s32.totalorder %s86, %s87
      %p99 = scmp.eq.s32.totalorder %s21, 3
      %p100 = por %p98, %p99
      %p102 = scmp.ne.s32.totalorder %s87, %s101
      %p103 = scmp.eq.s32.totalorder %s21, 0
      %p104 = por %p102, %p103
      %s106 = sadd.s32 %s105, 1
      %p109 = scmp.eq.s32.totalorder %s15, 3
      %p110 = scmp.ne.s32.totalorder %s105, %s107
      %p111 = scmp.eq.s32.totalorder %s15, 0
      %p112 = por %p110, %p111
      %p113 = scmp.ne.s32.totalorder %s105, %s107
      %p114 = scmp.eq.s32.totalorder %s20, 3
      %p115 = por %p113, %p114
      %p116 = scmp.ne.s32.totalorder %s107, %s108
      %p117 = scmp.eq.s32.totalorder %s20, 0
      %p118 = por %p116, %p117
      %p119 = scmp.ne.s32.totalorder %s107, %s108
      %p120 = scmp.eq.s32.totalorder %s21, 3
      %p121 = por %p119, %p120
      %p123 = scmp.ne.s32.totalorder %s108, %s122
      %p124 = scmp.eq.s32.totalorder %s21, 0
      %p125 = por %p123, %p124
      %s127 = sadd.s32 %s126, 1
      %p130 = scmp.eq.s32.totalorder %s15, 3
      %p131 = scmp.ne.s32.totalorder %s126, %s128
      %p132 = scmp.eq.s32.totalorder %s15, 0
      %p133 = por %p131, %p132
      %p134 = scmp.ne.s32.totalorder %s126, %s128
      %p135 = scmp.eq.s32.totalorder %s20, 3
      %p136 = por %p134, %p135
      %p137 = scmp.ne.s32.totalorder %s128, %s129
      %p138 = scmp.eq.s32.totalorder %s20, 0
      %p139 = por %p137, %p138
      %p140 = scmp.ne.s32.totalorder %s128, %s129
      %p141 = scmp.eq.s32.totalorder %s21, 3
      %p142 = por %p140, %p141
      %p144 = scmp.ne.s32.totalorder %s129, %s143
      %p145 = scmp.eq.s32.totalorder %s21, 0
      %p146 = por %p144, %p145
      %s147 = ssub.s32 %s22, %s34
      %s148 = ssub.s32 %s23, %s30
      %s149 = sor.u32 %s147, %s148
      %p150 = scmp.eq.s32.totalorder %s149, 0
      %s152 = sadd.s32 %s151, 1
      %s153 = scalar_select %p150, %s151, %s152
      %p156 = pneg %p150
      %p157 = scmp.eq.s32.totalorder %s15, 3
      %p158 = por %p156, %p157
      %p159 = scmp.ne.s32.totalorder %s151, %s154
      %p160 = scmp.eq.s32.totalorder %s15, 0
      %p161 = por %p159, %p160
      %p162 = scmp.ne.s32.totalorder %s151, %s154
      %p163 = scmp.eq.s32.totalorder %s20, 3
      %p164 = por %p162, %p163
      %p165 = scmp.ne.s32.totalorder %s154, %s155
      %p166 = scmp.eq.s32.totalorder %s20, 0
      %p167 = por %p165, %p166
      %p168 = scmp.ne.s32.totalorder %s154, %s155
      %p169 = scmp.eq.s32.totalorder %s21, 3
      %p170 = por %p168, %p169
      %p172 = scmp.ne.s32.totalorder %s155, %s171
      %p173 = scmp.eq.s32.totalorder %s21, 0
      %p174 = por %p172, %p173
      %p175 = scmp.le.s32.totalorder 1, %s15
      %p176 = scmp.lt.s32.totalorder %s15, 5
      %p177 = pnand %p175, %p176
      %p178 = pneg %p177
      // Predicated region
      $region9: #{tpu_custom_call.1} parent=5 // pred_check
        _
      $region10: #{tpu_custom_call.1} parent=5 // pred_check_branch
        %180 = sbr.rel (%p177) target = $region12
      $region11: #{tpu_custom_call.1} parent=5 // pred_region
        %s181 = ssub.s32 %s15, 1
        // Predicated region
        $region13: #{tpu_custom_call.1} parent=11 // pred_check
          %p182 = pneg %p76
        $region14: #{tpu_custom_call.1} parent=11 // pred_check_branch
          %184 = sbr.rel (%p182) target = $region16
        $region15: #{tpu_custom_call.1} parent=11 // pred_region
          _
        $region16: #{tpu_custom_call.1} parent=11 // pred_fallthru
          _
        // Predicated region
        $region17: #{tpu_custom_call.1} parent=11 // pred_check
          %p185 = pneg %p97
        $region18: #{tpu_custom_call.1} parent=11 // pred_check_branch
          %187 = sbr.rel (%p185) target = $region20
        $region19: #{tpu_custom_call.1} parent=11 // pred_region
          _
        $region20: #{tpu_custom_call.1} parent=11 // pred_fallthru
          _
        // Predicated region
        $region21: #{tpu_custom_call.1} parent=11 // pred_check
          %p188 = pneg %p118
        $region22: #{tpu_custom_call.1} parent=11 // pred_check_branch
          %190 = sbr.rel (%p188) target = $region24
        $region23: #{tpu_custom_call.1} parent=11 // pred_region
          _
        $region24: #{tpu_custom_call.1} parent=11 // pred_fallthru
          _
        // Predicated region
        $region25: #{tpu_custom_call.1} parent=11 // pred_check
          %p191 = pneg %p139
        $region26: #{tpu_custom_call.1} parent=11 // pred_check_branch
          %193 = sbr.rel (%p191) target = $region28
        $region27: #{tpu_custom_call.1} parent=11 // pred_region
          _
        $region28: #{tpu_custom_call.1} parent=11 // pred_fallthru
          _
      $region12: #{tpu_custom_call.1} parent=5 // pred_fallthru
        _
      %p194 = scmp.lt.s32.totalorder %s15, 4
      // Predicated region
      $region29: #{tpu_custom_call.1} parent=5 // pred_check
        %p195 = pneg %p194
      $region30: #{tpu_custom_call.1} parent=5 // pred_check_branch
        %197 = sbr.rel (%p195) target = $region32
      $region31: #{tpu_custom_call.1} parent=5 // pred_region
        // Predicated region
        $region33: #{tpu_custom_call.1} parent=31 // pred_check
          %p198 = pneg %p49
        $region34: #{tpu_custom_call.1} parent=31 // pred_check_branch
          %200 = sbr.rel (%p198) target = $region36
        $region35: #{tpu_custom_call.1} parent=31 // pred_region
          %s201 = smul.u32 4, %s23
          %p202 = scmp.lt.s32.totalorder %s22, 1
          %s203 = scalar_select %p202, %s22, 1
          %p204 = scmp.lt.s32.totalorder %s201, 7
          %s205 = scalar_select %p204, %s201, 7
          %s206 = smul.addr %s203, 8
          %s207 = sadd.s32 %s205, %s206
          %s208 = smul.addr %s207, 8
          %s209 = scalar_lea.vmem %s0, %s208
          %s210 = smul.u32 4, %s23
        $region36: #{tpu_custom_call.1} parent=31 // pred_fallthru
          _
      $region32: #{tpu_custom_call.1} parent=5 // pred_fallthru
        _
      %p211 = scmp.le.s32.totalorder 1, %s15
      %p212 = scmp.lt.s32.totalorder %s15, 5
      %p213 = pnand %p211, %p212
      %p214 = pneg %p213
      // Predicated region
      $region37: #{tpu_custom_call.1} parent=5 // pred_check
        _
      $region38: #{tpu_custom_call.1} parent=5 // pred_check_branch
        %216 = sbr.rel (%p213) target = $region40
      $region39: #{tpu_custom_call.1} parent=5 // pred_region
        %s217 = ssub.s32 %s15, 1
        %s218 = smul.u32 4, %s25
        %p219 = scmp.lt.s32.totalorder %s24, 1
        %s220 = scalar_select %p219, %s24, 1
        %p221 = scmp.lt.s32.totalorder %s218, 7
        %s222 = scalar_select %p221, %s218, 7
        %s223 = smul.addr %s220, 8
        %s224 = sadd.s32 %s222, %s223
        %s225 = smul.addr %s224, 8
        %s226 = scalar_lea.vmem %s0, %s225
        %p227 = pneg %p55
        %p228 = pneg %p52
        %p229 = pneg %p76
        %p230 = pneg %p73
        %p231 = pneg %p97
        %p232 = pneg %p94
        %p233 = pneg %p118
        %p234 = pneg %p115
        %p235 = pneg %p139
        %p236 = pneg %p136
        %p237 = pneg %p167
        %p238 = pneg %p164
        %s239 = sand.u32 %s154, 1
        %s240 = scalar_lea.sflag [#allocation4], %s239
        %s241 = sand.u32 %s154, 1
        %s242 = smul.addr %s241, 4
        %s243 = scalar_lea.vmem [#allocation3], %s242
        %s244 = smul.u32 4, %s25
        %p245 = scmp.lt.s32.totalorder %s24, 1
        %s246 = scalar_select %p245, %s24, 1
        %p247 = scmp.lt.s32.totalorder %s244, 7
        %s248 = scalar_select %p247, %s244, 7
        %s249 = smul.addr %s246, 8
        %s250 = sadd.s32 %s248, %s249
        %s251 = smul.addr %s250, 8
        %s252 = scalar_lea.vmem %s0, %s251
        %s253 = smul.u32 4, %s25
        %s254 = smul.u32 4, %s25
        %v255 = vld [vmem:[%s252] sm:$0xff]
        %v256 = vld [vmem:[%s252 + $0x8] sm:$0xff]
        %v257 = vld [vmem:[%s252 + $0x10] sm:$0xff]
        %v258 = vld [vmem:[%s252 + $0x18] sm:$0xff]
        %v259 = vld [vmem:[%s1] sm:$0xff]
        %v260 = vld [vmem:[%s1 + $0x8] sm:$0xff]
        %262 = vset.pattern.permute.xlu0 0
        %263 = vperm.xlu0 %262, %v259
        %v264 = vpop.permute.xlu0 %263
        %267 = vset.pattern.permute.xlu0 0
        %268 = vperm.xlu0 %267, %v260
        %v269 = vpop.permute.xlu0 %268
        %v271 = vperm.slane %v255, 0
        %v272 = vperm.slane %v256, 0
        %v273 = vperm.slane %v257, 0
        %v274 = vperm.slane %v258, 0
        %v275 = vmul.f32 %v264, %v271
        %v276 = vmul.f32 %v264, %v272
        %v277 = vmul.f32 %v264, %v273
        %v278 = vmul.f32 %v264, %v274
        %v279 = vmul.f32 %v269, %v271
        %v280 = vmul.f32 %v269, %v272
        %v281 = vmul.f32 %v269, %v273
        %v282 = vmul.f32 %v269, %v274
        %s283 = scalar_lea.vmem %s1, 16
        %v284 = vld [vmem:[%s283] sm:$0xff]
        %v285 = vld [vmem:[%s283 + $0x8] sm:$0xff]
        %287 = vset.pattern.permute.xlu0 0
        %288 = vperm.xlu0 %287, %v284
        %v289 = vpop.permute.xlu0 %288
        %292 = vset.pattern.permute.xlu0 0
        %293 = vperm.xlu0 %292, %v285
        %v294 = vpop.permute.xlu0 %293
        %v296 = vperm.slane %v255, 1
        %v297 = vperm.slane %v256, 1
        %v298 = vperm.slane %v257, 1
        %v299 = vperm.slane %v258, 1
        %v300 = vmul.f32 %v289, %v296
        %v301 = vmul.f32 %v289, %v297
        %v302 = vmul.f32 %v289, %v298
        %v303 = vmul.f32 %v289, %v299
        %v304 = vmul.f32 %v294, %v296
        %v305 = vmul.f32 %v294, %v297
        %v306 = vmul.f32 %v294, %v298
        %v307 = vmul.f32 %v294, %v299
        %v308 = vadd.f32 %v275, %v300
        %v309 = vadd.f32 %v276, %v301
        %v310 = vadd.f32 %v277, %v302
        %v311 = vadd.f32 %v278, %v303
        %v312 = vadd.f32 %v279, %v304
        %v313 = vadd.f32 %v280, %v305
        %v314 = vadd.f32 %v281, %v306
        %v315 = vadd.f32 %v282, %v307
        %s316 = scalar_lea.vmem %s1, 32
        %v317 = vld [vmem:[%s316] sm:$0xff]
        %v318 = vld [vmem:[%s316 + $0x8] sm:$0xff]
        %320 = vset.pattern.permute.xlu0 0
        %321 = vperm.xlu0 %320, %v317
        %v322 = vpop.permute.xlu0 %321
        %325 = vset.pattern.permute.xlu0 0
        %326 = vperm.xlu0 %325, %v318
        %v327 = vpop.permute.xlu0 %326
        %v329 = vperm.slane %v255, 2
        %v330 = vperm.slane %v256, 2
        %v331 = vperm.slane %v257, 2
        %v332 = vperm.slane %v258, 2
        %v333 = vmul.f32 %v322, %v329
        %v334 = vmul.f32 %v322, %v330
        %v335 = vmul.f32 %v322, %v331
        %v336 = vmul.f32 %v322, %v332
        %v337 = vmul.f32 %v327, %v329
        %v338 = vmul.f32 %v327, %v330
        %v339 = vmul.f32 %v327, %v331
        %v340 = vmul.f32 %v327, %v332
        %v341 = vadd.f32 %v308, %v333
        %v342 = vadd.f32 %v309, %v334
        %v343 = vadd.f32 %v310, %v335
        %v344 = vadd.f32 %v311, %v336
        %v345 = vadd.f32 %v312, %v337
        %v346 = vadd.f32 %v313, %v338
        %v347 = vadd.f32 %v314, %v339
        %v348 = vadd.f32 %v315, %v340
        %s349 = scalar_lea.vmem %s1, 48
        %v350 = vld [vmem:[%s349] sm:$0xff]
        %v351 = vld [vmem:[%s349 + $0x8] sm:$0xff]
        %353 = vset.pattern.permute.xlu0 0
        %354 = vperm.xlu0 %353, %v350
        %v355 = vpop.permute.xlu0 %354
        %358 = vset.pattern.permute.xlu0 0
        %359 = vperm.xlu0 %358, %v351
        %v360 = vpop.permute.xlu0 %359
        %v362 = vperm.slane %v255, 3
        %v363 = vperm.slane %v256, 3
        %v364 = vperm.slane %v257, 3
        %v365 = vperm.slane %v258, 3
        %v366 = vmul.f32 %v355, %v362
        %v367 = vmul.f32 %v355, %v363
        %v368 = vmul.f32 %v355, %v364
        %v369 = vmul.f32 %v355, %v365
        %v370 = vmul.f32 %v360, %v362
        %v371 = vmul.f32 %v360, %v363
        %v372 = vmul.f32 %v360, %v364
        %v373 = vmul.f32 %v360, %v365
        %v374 = vadd.f32 %v341, %v366
        %v375 = vadd.f32 %v342, %v367
        %v376 = vadd.f32 %v343, %v368
        %v377 = vadd.f32 %v344, %v369
        %v378 = vadd.f32 %v345, %v370
        %v379 = vadd.f32 %v346, %v371
        %v380 = vadd.f32 %v347, %v372
        %v381 = vadd.f32 %v348, %v373
        %s382 = scalar_lea.vmem %s1, 64
        %v383 = vld [vmem:[%s382] sm:$0xff]
        %v384 = vld [vmem:[%s382 + $0x8] sm:$0xff]
        %386 = vset.pattern.permute.xlu0 0
        %387 = vperm.xlu0 %386, %v383
        %v388 = vpop.permute.xlu0 %387
        %391 = vset.pattern.permute.xlu0 0
        %392 = vperm.xlu0 %391, %v384
        %v393 = vpop.permute.xlu0 %392
        %v395 = vperm.slane %v255, 4
        %v396 = vperm.slane %v256, 4
        %v397 = vperm.slane %v257, 4
        %v398 = vperm.slane %v258, 4
        %v399 = vmul.f32 %v388, %v395
        %v400 = vmul.f32 %v388, %v396
        %v401 = vmul.f32 %v388, %v397
        %v402 = vmul.f32 %v388, %v398
        %v403 = vmul.f32 %v393, %v395
        %v404 = vmul.f32 %v393, %v396
        %v405 = vmul.f32 %v393, %v397
        %v406 = vmul.f32 %v393, %v398
        %v407 = vadd.f32 %v374, %v399
        %v408 = vadd.f32 %v375, %v400
        %v409 = vadd.f32 %v376, %v401
        %v410 = vadd.f32 %v377, %v402
        %v411 = vadd.f32 %v378, %v403
        %v412 = vadd.f32 %v379, %v404
        %v413 = vadd.f32 %v380, %v405
        %v414 = vadd.f32 %v381, %v406
        %s415 = scalar_lea.vmem %s1, 80
        %v416 = vld [vmem:[%s415] sm:$0xff]
        %v417 = vld [vmem:[%s415 + $0x8] sm:$0xff]
        %419 = vset.pattern.permute.xlu0 0
        %420 = vperm.xlu0 %419, %v416
        %v421 = vpop.permute.xlu0 %420
        %424 = vset.pattern.permute.xlu0 0
        %425 = vperm.xlu0 %424, %v417
        %v426 = vpop.permute.xlu0 %425
        %v428 = vperm.slane %v255, 5
        %v429 = vperm.slane %v256, 5
        %v430 = vperm.slane %v257, 5
        %v431 = vperm.slane %v258, 5
        %v432 = vmul.f32 %v421, %v428
        %v433 = vmul.f32 %v421, %v429
        %v434 = vmul.f32 %v421, %v430
        %v435 = vmul.f32 %v421, %v431
        %v436 = vmul.f32 %v426, %v428
        %v437 = vmul.f32 %v426, %v429
        %v438 = vmul.f32 %v426, %v430
        %v439 = vmul.f32 %v426, %v431
        %v440 = vadd.f32 %v407, %v432
        %v441 = vadd.f32 %v408, %v433
        %v442 = vadd.f32 %v409, %v434
        %v443 = vadd.f32 %v410, %v435
        %v444 = vadd.f32 %v411, %v436
        %v445 = vadd.f32 %v412, %v437
        %v446 = vadd.f32 %v413, %v438
        %v447 = vadd.f32 %v414, %v439
        %s448 = scalar_lea.vmem %s1, 96
        %v449 = vld [vmem:[%s448] sm:$0xff]
        %v450 = vld [vmem:[%s448 + $0x8] sm:$0xff]
        %452 = vset.pattern.permute.xlu0 0
        %453 = vperm.xlu0 %452, %v449
        %v454 = vpop.permute.xlu0 %453
        %457 = vset.pattern.permute.xlu0 0
        %458 = vperm.xlu0 %457, %v450
        %v459 = vpop.permute.xlu0 %458
        %v461 = vperm.slane %v255, 6
        %v462 = vperm.slane %v256, 6
        %v463 = vperm.slane %v257, 6
        %v464 = vperm.slane %v258, 6
        %v465 = vmul.f32 %v454, %v461
        %v466 = vmul.f32 %v454, %v462
        %v467 = vmul.f32 %v454, %v463
        %v468 = vmul.f32 %v454, %v464
        %v469 = vmul.f32 %v459, %v461
        %v470 = vmul.f32 %v459, %v462
        %v471 = vmul.f32 %v459, %v463
        %v472 = vmul.f32 %v459, %v464
        %v473 = vadd.f32 %v440, %v465
        %v474 = vadd.f32 %v441, %v466
        %v475 = vadd.f32 %v442, %v467
        %v476 = vadd.f32 %v443, %v468
        %v477 = vadd.f32 %v444, %v469
        %v478 = vadd.f32 %v445, %v470
        %v479 = vadd.f32 %v446, %v471
        %v480 = vadd.f32 %v447, %v472
        %s481 = scalar_lea.vmem %s1, 112
        %v482 = vld [vmem:[%s481] sm:$0xff]
        %v483 = vld [vmem:[%s481 + $0x8] sm:$0xff]
        %485 = vset.pattern.permute.xlu0 0
        %486 = vperm.xlu0 %485, %v482
        %v487 = vpop.permute.xlu0 %486
        %490 = vset.pattern.permute.xlu0 0
        %491 = vperm.xlu0 %490, %v483
        %v492 = vpop.permute.xlu0 %491
        %v494 = vperm.slane %v255, 7
        %v495 = vperm.slane %v256, 7
        %v496 = vperm.slane %v257, 7
        %v497 = vperm.slane %v258, 7
        %v498 = vmul.f32 %v487, %v494
        %v499 = vmul.f32 %v487, %v495
        %v500 = vmul.f32 %v487, %v496
        %v501 = vmul.f32 %v487, %v497
        %v502 = vmul.f32 %v492, %v494
        %v503 = vmul.f32 %v492, %v495
        %v504 = vmul.f32 %v492, %v496
        %v505 = vmul.f32 %v492, %v497
        %v506 = vadd.f32 %v473, %v498
        %v507 = vadd.f32 %v474, %v499
        %v508 = vadd.f32 %v475, %v500
        %v509 = vadd.f32 %v476, %v501
        %v510 = vadd.f32 %v477, %v502
        %v511 = vadd.f32 %v478, %v503
        %v512 = vadd.f32 %v479, %v504
        %v513 = vadd.f32 %v480, %v505
        %v514 = vld [vmem:[%s2] sm:$0xff]
        %v515 = vld [vmem:[%s2 + $0x8] sm:$0xff]
        %517 = vset.pattern.permute.xlu0 0
        %518 = vperm.xlu0 %517, %v514
        %v519 = vpop.permute.xlu0 %518
        %522 = vset.pattern.permute.xlu0 0
        %523 = vperm.xlu0 %522, %v515
        %v524 = vpop.permute.xlu0 %523
        %v526 = vadd.f32 %v506, %v519
        %v527 = vadd.f32 %v507, %v519
        %v528 = vadd.f32 %v508, %v519
        %v529 = vadd.f32 %v509, %v519
        %v530 = vadd.f32 %v510, %v524
        %v531 = vadd.f32 %v511, %v524
        %v532 = vadd.f32 %v512, %v524
        %v533 = vadd.f32 %v513, %v524
        %v534 = vmul.f32 %v526, 0.5
        %v535 = vmul.f32 %v527, 0.5
        %v536 = vmul.f32 %v528, 0.5
        %v537 = vmul.f32 %v529, 0.5
        %v538 = vmul.f32 %v530, 0.5
        %v539 = vmul.f32 %v531, 0.5
        %v540 = vmul.f32 %v532, 0.5
        %v541 = vmul.f32 %v533, 0.5
        %v542 = vmul.f32 %v526, 0.70710677
        %v543 = vmul.f32 %v527, 0.70710677
        %v544 = vmul.f32 %v528, 0.70710677
        %v545 = vmul.f32 %v529, 0.70710677
        %v546 = vmul.f32 %v530, 0.70710677
        %v547 = vmul.f32 %v531, 0.70710677
        %v548 = vmul.f32 %v532, 0.70710677
        %v549 = vmul.f32 %v533, 0.70710677
        %v550 = vmul.f32 %v542, %v542
        %v551 = vmin.f32 16.0, %v550
        %v552 = vmul.f32 %v551, 2.1237322e-06
        %v553 = vadd.f32 %v552, 0.00028619796
        %v554 = vmul.f32 %v551, %v553
        %v555 = vadd.f32 %v554, 0.0036580483
        %v556 = vmul.f32 %v551, %v555
        %v557 = vadd.f32 %v556, 0.05243302
        %v558 = vmul.f32 %v551, %v557
        %v559 = vadd.f32 %v558, 0.18741608
        %v560 = vmul.f32 %v551, %v559
        %v561 = vadd.f32 %v560, 1.1283791
        %v562 = vmul.f32 %v542, %v561
        %v563 = vmul.f32 %v551, 3.8918573e-05
        %v564 = vadd.f32 %v563, 0.001143296
        %v565 = vmul.f32 %v551, %v564
        %v566 = vadd.f32 %v565, 0.014752088
        %v567 = vmul.f32 %v551, %v566
        %v568 = vadd.f32 %v567, 0.112945676
        %v569 = vmul.f32 %v551, %v568
        %v570 = vadd.f32 %v569, 0.4994258
        %v571 = vmul.f32 %v551, %v570
        %v572 = vadd.f32 %v571, 1.0
        %v573 = vrcp.pop %v572
        %v574 = vmul.f32 %v572, %v573
        %v575 = vsub.f32 1.0, %v574
        %v576 = vmul.f32 %v573, %v575
        %v577 = vadd.f32 %v573, %v576
        %vm578 = vweird.f32 %v572
        %vm579 = vweird.f32 %v573
        %vm580 = vmor %vm578, %vm579
        %v581 = vsel %vm580, %v573, %v577
        %v582 = vand.u32 2147483647, %v572
        %vm583 = vcmp.eq.f32.partialorder %v582, 8.507059e+37
        %v584 = vand.u32 %v572, 2147483648
        %v585 = vor.u32 1.1754944e-38, %v584
        %v586 = vsel %vm583, %v585, %v581
        %v587 = vmul.f32 %v562, %v586
        %v588 = vmin.f32 %v587, 1.0
        %v589 = vmax.f32 %v588, -1.0
        %v590 = vmul.f32 %v543, %v543
        %v591 = vmin.f32 16.0, %v590
        %v592 = vmul.f32 %v591, 2.1237322e-06
        %v593 = vadd.f32 %v592, 0.00028619796
        %v594 = vmul.f32 %v591, %v593
        %v595 = vadd.f32 %v594, 0.0036580483
        %v596 = vmul.f32 %v591, %v595
        %v597 = vadd.f32 %v596, 0.05243302
        %v598 = vmul.f32 %v591, %v597
        %v599 = vadd.f32 %v598, 0.18741608
        %v600 = vmul.f32 %v591, %v599
        %v601 = vadd.f32 %v600, 1.1283791
        %v602 = vmul.f32 %v543, %v601
        %v603 = vmul.f32 %v591, 3.8918573e-05
        %v604 = vadd.f32 %v603, 0.001143296
        %v605 = vmul.f32 %v591, %v604
        %v606 = vadd.f32 %v605, 0.014752088
        %v607 = vmul.f32 %v591, %v606
        %v608 = vadd.f32 %v607, 0.112945676
        %v609 = vmul.f32 %v591, %v608
        %v610 = vadd.f32 %v609, 0.4994258
        %v611 = vmul.f32 %v591, %v610
        %v612 = vadd.f32 %v611, 1.0
        %v613 = vrcp.pop %v612
        %v614 = vmul.f32 %v612, %v613
        %v615 = vsub.f32 1.0, %v614
        %v616 = vmul.f32 %v613, %v615
        %v617 = vadd.f32 %v613, %v616
        %vm618 = vweird.f32 %v612
        %vm619 = vweird.f32 %v613
        %vm620 = vmor %vm618, %vm619
        %v621 = vsel %vm620, %v613, %v617
        %v622 = vand.u32 2147483647, %v612
        %vm623 = vcmp.eq.f32.partialorder %v622, 8.507059e+37
        %v624 = vand.u32 %v612, 2147483648
        %v625 = vor.u32 1.1754944e-38, %v624
        %v626 = vsel %vm623, %v625, %v621
        %v627 = vmul.f32 %v602, %v626
        %v628 = vmin.f32 %v627, 1.0
        %v629 = vmax.f32 %v628, -1.0
        %v630 = vmul.f32 %v544, %v544
        %v631 = vmin.f32 16.0, %v630
        %v632 = vmul.f32 %v631, 2.1237322e-06
        %v633 = vadd.f32 %v632, 0.00028619796
        %v634 = vmul.f32 %v631, %v633
        %v635 = vadd.f32 %v634, 0.0036580483
        %v636 = vmul.f32 %v631, %v635
        %v637 = vadd.f32 %v636, 0.05243302
        %v638 = vmul.f32 %v631, %v637
        %v639 = vadd.f32 %v638, 0.18741608
        %v640 = vmul.f32 %v631, %v639
        %v641 = vadd.f32 %v640, 1.1283791
        %v642 = vmul.f32 %v544, %v641
        %v643 = vmul.f32 %v631, 3.8918573e-05
        %v644 = vadd.f32 %v643, 0.001143296
        %v645 = vmul.f32 %v631, %v644
        %v646 = vadd.f32 %v645, 0.014752088
        %v647 = vmul.f32 %v631, %v646
        %v648 = vadd.f32 %v647, 0.112945676
        %v649 = vmul.f32 %v631, %v648
        %v650 = vadd.f32 %v649, 0.4994258
        %v651 = vmul.f32 %v631, %v650
        %v652 = vadd.f32 %v651, 1.0
        %v653 = vrcp.pop %v652
        %v654 = vmul.f32 %v652, %v653
        %v655 = vsub.f32 1.0, %v654
        %v656 = vmul.f32 %v653, %v655
        %v657 = vadd.f32 %v653, %v656
        %vm658 = vweird.f32 %v652
        %vm659 = vweird.f32 %v653
        %vm660 = vmor %vm658, %vm659
        %v661 = vsel %vm660, %v653, %v657
        %v662 = vand.u32 2147483647, %v652
        %vm663 = vcmp.eq.f32.partialorder %v662, 8.507059e+37
        %v664 = vand.u32 %v652, 2147483648
        %v665 = vor.u32 1.1754944e-38, %v664
        %v666 = vsel %vm663, %v665, %v661
        %v667 = vmul.f32 %v642, %v666
        %v668 = vmin.f32 %v667, 1.0
        %v669 = vmax.f32 %v668, -1.0
        %v670 = vmul.f32 %v545, %v545
        %v671 = vmin.f32 16.0, %v670
        %v672 = vmul.f32 %v671, 2.1237322e-06
        %v673 = vadd.f32 %v672, 0.00028619796
        %v674 = vmul.f32 %v671, %v673
        %v675 = vadd.f32 %v674, 0.0036580483
        %v676 = vmul.f32 %v671, %v675
        %v677 = vadd.f32 %v676, 0.05243302
        %v678 = vmul.f32 %v671, %v677
        %v679 = vadd.f32 %v678, 0.18741608
        %v680 = vmul.f32 %v671, %v679
        %v681 = vadd.f32 %v680, 1.1283791
        %v682 = vmul.f32 %v545, %v681
        %v683 = vmul.f32 %v671, 3.8918573e-05
        %v684 = vadd.f32 %v683, 0.001143296
        %v685 = vmul.f32 %v671, %v684
        %v686 = vadd.f32 %v685, 0.014752088
        %v687 = vmul.f32 %v671, %v686
        %v688 = vadd.f32 %v687, 0.112945676
        %v689 = vmul.f32 %v671, %v688
        %v690 = vadd.f32 %v689, 0.4994258
        %v691 = vmul.f32 %v671, %v690
        %v692 = vadd.f32 %v691, 1.0
        %v693 = vrcp.pop %v692
        %v694 = vmul.f32 %v692, %v693
        %v695 = vsub.f32 1.0, %v694
        %v696 = vmul.f32 %v693, %v695
        %v697 = vadd.f32 %v693, %v696
        %vm698 = vweird.f32 %v692
        %vm699 = vweird.f32 %v693
        %vm700 = vmor %vm698, %vm699
        %v701 = vsel %vm700, %v693, %v697
        %v702 = vand.u32 2147483647, %v692
        %vm703 = vcmp.eq.f32.partialorder %v702, 8.507059e+37
        %v704 = vand.u32 %v692, 2147483648
        %v705 = vor.u32 1.1754944e-38, %v704
        %v706 = vsel %vm703, %v705, %v701
        %v707 = vmul.f32 %v682, %v706
        %v708 = vmin.f32 %v707, 1.0
        %v709 = vmax.f32 %v708, -1.0
        %v710 = vmul.f32 %v546, %v546
        %v711 = vmin.f32 16.0, %v710
        %v712 = vmul.f32 %v711, 2.1237322e-06
        %v713 = vadd.f32 %v712, 0.00028619796
        %v714 = vmul.f32 %v711, %v713
        %v715 = vadd.f32 %v714, 0.0036580483
        %v716 = vmul.f32 %v711, %v715
        %v717 = vadd.f32 %v716, 0.05243302
        %v718 = vmul.f32 %v711, %v717
        %v719 = vadd.f32 %v718, 0.18741608
        %v720 = vmul.f32 %v711, %v719
        %v721 = vadd.f32 %v720, 1.1283791
        %v722 = vmul.f32 %v546, %v721
        %v723 = vmul.f32 %v711, 3.8918573e-05
        %v724 = vadd.f32 %v723, 0.001143296
        %v725 = vmul.f32 %v711, %v724
        %v726 = vadd.f32 %v725, 0.014752088
        %v727 = vmul.f32 %v711, %v726
        %v728 = vadd.f32 %v727, 0.112945676
        %v729 = vmul.f32 %v711, %v728
        %v730 = vadd.f32 %v729, 0.4994258
        %v731 = vmul.f32 %v711, %v730
        %v732 = vadd.f32 %v731, 1.0
        %v733 = vrcp.pop %v732
        %v734 = vmul.f32 %v732, %v733
        %v735 = vsub.f32 1.0, %v734
        %v736 = vmul.f32 %v733, %v735
        %v737 = vadd.f32 %v733, %v736
        %vm738 = vweird.f32 %v732
        %vm739 = vweird.f32 %v733
        %vm740 = vmor %vm738, %vm739
        %v741 = vsel %vm740, %v733, %v737
        %v742 = vand.u32 2147483647, %v732
        %vm743 = vcmp.eq.f32.partialorder %v742, 8.507059e+37
        %v744 = vand.u32 %v732, 2147483648
        %v745 = vor.u32 1.1754944e-38, %v744
        %v746 = vsel %vm743, %v745, %v741
        %v747 = vmul.f32 %v722, %v746
        %v748 = vmin.f32 %v747, 1.0
        %v749 = vmax.f32 %v748, -1.0
        %v750 = vmul.f32 %v547, %v547
        %v751 = vmin.f32 16.0, %v750
        %v752 = vmul.f32 %v751, 2.1237322e-06
        %v753 = vadd.f32 %v752, 0.00028619796
        %v754 = vmul.f32 %v751, %v753
        %v755 = vadd.f32 %v754, 0.0036580483
        %v756 = vmul.f32 %v751, %v755
        %v757 = vadd.f32 %v756, 0.05243302
        %v758 = vmul.f32 %v751, %v757
        %v759 = vadd.f32 %v758, 0.18741608
        %v760 = vmul.f32 %v751, %v759
        %v761 = vadd.f32 %v760, 1.1283791
        %v762 = vmul.f32 %v547, %v761
        %v763 = vmul.f32 %v751, 3.8918573e-05
        %v764 = vadd.f32 %v763, 0.001143296
        %v765 = vmul.f32 %v751, %v764
        %v766 = vadd.f32 %v765, 0.014752088
        %v767 = vmul.f32 %v751, %v766
        %v768 = vadd.f32 %v767, 0.112945676
        %v769 = vmul.f32 %v751, %v768
        %v770 = vadd.f32 %v769, 0.4994258
        %v771 = vmul.f32 %v751, %v770
        %v772 = vadd.f32 %v771, 1.0
        %v773 = vrcp.pop %v772
        %v774 = vmul.f32 %v772, %v773
        %v775 = vsub.f32 1.0, %v774
        %v776 = vmul.f32 %v773, %v775
        %v777 = vadd.f32 %v773, %v776
        %vm778 = vweird.f32 %v772
        %vm779 = vweird.f32 %v773
        %vm780 = vmor %vm778, %vm779
        %v781 = vsel %vm780, %v773, %v777
        %v782 = vand.u32 2147483647, %v772
        %vm783 = vcmp.eq.f32.partialorder %v782, 8.507059e+37
        %v784 = vand.u32 %v772, 2147483648
        %v785 = vor.u32 1.1754944e-38, %v784
        %v786 = vsel %vm783, %v785, %v781
        %v787 = vmul.f32 %v762, %v786
        %v788 = vmin.f32 %v787, 1.0
        %v789 = vmax.f32 %v788, -1.0
        %v790 = vmul.f32 %v548, %v548
        %v791 = vmin.f32 16.0, %v790
        %v792 = vmul.f32 %v791, 2.1237322e-06
        %v793 = vadd.f32 %v792, 0.00028619796
        %v794 = vmul.f32 %v791, %v793
        %v795 = vadd.f32 %v794, 0.0036580483
        %v796 = vmul.f32 %v791, %v795
        %v797 = vadd.f32 %v796, 0.05243302
        %v798 = vmul.f32 %v791, %v797
        %v799 = vadd.f32 %v798, 0.18741608
        %v800 = vmul.f32 %v791, %v799
        %v801 = vadd.f32 %v800, 1.1283791
        %v802 = vmul.f32 %v548, %v801
        %v803 = vmul.f32 %v791, 3.8918573e-05
        %v804 = vadd.f32 %v803, 0.001143296
        %v805 = vmul.f32 %v791, %v804
        %v806 = vadd.f32 %v805, 0.014752088
        %v807 = vmul.f32 %v791, %v806
        %v808 = vadd.f32 %v807, 0.112945676
        %v809 = vmul.f32 %v791, %v808
        %v810 = vadd.f32 %v809, 0.4994258
        %v811 = vmul.f32 %v791, %v810
        %v812 = vadd.f32 %v811, 1.0
        %v813 = vrcp.pop %v812
        %v814 = vmul.f32 %v812, %v813
        %v815 = vsub.f32 1.0, %v814
        %v816 = vmul.f32 %v813, %v815
        %v817 = vadd.f32 %v813, %v816
        %vm818 = vweird.f32 %v812
        %vm819 = vweird.f32 %v813
        %vm820 = vmor %vm818, %vm819
        %v821 = vsel %vm820, %v813, %v817
        %v822 = vand.u32 2147483647, %v812
        %vm823 = vcmp.eq.f32.partialorder %v822, 8.507059e+37
        %v824 = vand.u32 %v812, 2147483648
        %v825 = vor.u32 1.1754944e-38, %v824
        %v826 = vsel %vm823, %v825, %v821
        %v827 = vmul.f32 %v802, %v826
        %v828 = vmin.f32 %v827, 1.0
        %v829 = vmax.f32 %v828, -1.0
        %v830 = vmul.f32 %v549, %v549
        %v831 = vmin.f32 16.0, %v830
        %v832 = vmul.f32 %v831, 2.1237322e-06
        %v833 = vadd.f32 %v832, 0.00028619796
        %v834 = vmul.f32 %v831, %v833
        %v835 = vadd.f32 %v834, 0.0036580483
        %v836 = vmul.f32 %v831, %v835
        %v837 = vadd.f32 %v836, 0.05243302
        %v838 = vmul.f32 %v831, %v837
        %v839 = vadd.f32 %v838, 0.18741608
        %v840 = vmul.f32 %v831, %v839
        %v841 = vadd.f32 %v840, 1.1283791
        %v842 = vmul.f32 %v549, %v841
        %v843 = vmul.f32 %v831, 3.8918573e-05
        %v844 = vadd.f32 %v843, 0.001143296
        %v845 = vmul.f32 %v831, %v844
        %v846 = vadd.f32 %v845, 0.014752088
        %v847 = vmul.f32 %v831, %v846
        %v848 = vadd.f32 %v847, 0.112945676
        %v849 = vmul.f32 %v831, %v848
        %v850 = vadd.f32 %v849, 0.4994258
        %v851 = vmul.f32 %v831, %v850
        %v852 = vadd.f32 %v851, 1.0
        %v853 = vrcp.pop %v852
        %v854 = vmul.f32 %v852, %v853
        %v855 = vsub.f32 1.0, %v854
        %v856 = vmul.f32 %v853, %v855
        %v857 = vadd.f32 %v853, %v856
        %vm858 = vweird.f32 %v852
        %vm859 = vweird.f32 %v853
        %vm860 = vmor %vm858, %vm859
        %v861 = vsel %vm860, %v853, %v857
        %v862 = vand.u32 2147483647, %v852
        %vm863 = vcmp.eq.f32.partialorder %v862, 8.507059e+37
        %v864 = vand.u32 %v852, 2147483648
        %v865 = vor.u32 1.1754944e-38, %v864
        %v866 = vsel %vm863, %v865, %v861
        %v867 = vmul.f32 %v842, %v866
        %v868 = vmin.f32 %v867, 1.0
        %v869 = vmax.f32 %v868, -1.0
        %v870 = vadd.f32 %v589, 1.0
        %v871 = vadd.f32 %v629, 1.0
        %v872 = vadd.f32 %v669, 1.0
        %v873 = vadd.f32 %v709, 1.0
        %v874 = vadd.f32 %v749, 1.0
        %v875 = vadd.f32 %v789, 1.0
        %v876 = vadd.f32 %v829, 1.0
        %v877 = vadd.f32 %v869, 1.0
        %v878 = vmul.f32 %v534, %v870
        %v879 = vmul.f32 %v535, %v871
        %v880 = vmul.f32 %v536, %v872
        %v881 = vmul.f32 %v537, %v873
        %v882 = vmul.f32 %v538, %v874
        %v883 = vmul.f32 %v539, %v875
        %v884 = vmul.f32 %v540, %v876
        %v885 = vmul.f32 %v541, %v877
        %v886 = vld [vmem:[%s3] sm:$0xff]
        %v887 = vld [vmem:[%s3 + $0x8] sm:$0xff]
        %889 = vset.pattern.permute.xlu0 0
        %890 = vperm.xlu0 %889, %v886
        %v891 = vpop.permute.xlu0 %890
        %894 = vset.pattern.permute.xlu0 0
        %895 = vperm.xlu0 %894, %v887
        %v896 = vpop.permute.xlu0 %895
        %v898 = vmul.f32 %v878, %v891
        %v899 = vmul.f32 %v879, %v891
        %v900 = vmul.f32 %v880, %v891
        %v901 = vmul.f32 %v881, %v891
        %v902 = vmul.f32 %v882, %v896
        %v903 = vmul.f32 %v883, %v896
        %v904 = vmul.f32 %v884, %v896
        %v905 = vmul.f32 %v885, %v896
        %v906 = vadd.f32 %v898, %v902
        %v907 = vrot.slane %v906, 4
        %v908 = vadd.f32 %v906, %v907
        %v909 = vrot.slane %v908, 2
        %v910 = vadd.f32 %v908, %v909
        %v911 = vrot.slane %v910, 1
        %v912 = vadd.f32 %v910, %v911
        %v913 = vadd.f32 %v899, %v903
        %v914 = vrot.slane %v913, 4
        %v915 = vadd.f32 %v913, %v914
        %v916 = vrot.slane %v915, 2
        %v917 = vadd.f32 %v915, %v916
        %v918 = vrot.slane %v917, 1
        %v919 = vadd.f32 %v917, %v918
        %v920 = vadd.f32 %v900, %v904
        %v921 = vrot.slane %v920, 4
        %v922 = vadd.f32 %v920, %v921
        %v923 = vrot.slane %v922, 2
        %v924 = vadd.f32 %v922, %v923
        %v925 = vrot.slane %v924, 1
        %v926 = vadd.f32 %v924, %v925
        %v927 = vadd.f32 %v901, %v905
        %v928 = vrot.slane %v927, 4
        %v929 = vadd.f32 %v927, %v928
        %v930 = vrot.slane %v929, 2
        %v931 = vadd.f32 %v929, %v930
        %v932 = vrot.slane %v931, 1
        %v933 = vadd.f32 %v931, %v932
        %s934 = sld [smem:[#allocation2]]
        %v935 = vstv %s934
        %v936 = vadd.f32 %v912, %v935
        %v937 = vadd.f32 %v919, %v935
        %v938 = vadd.f32 %v926, %v935
        %v939 = vadd.f32 %v933, %v935
        %v944 = vrot.slane %v937, 7
        %v945 = vrot.slane %v938, 6
        %v946 = vrot.slane %v939, 5
        %vm947 = vcmask 1040384
        %v948 = vsel %vm947, %v936, %v944
        %vm949 = vcmask 1042434
        %v950 = vsel %vm949, %v945, %v946
        %vm951 = vcmask 1041408
        %v952 = vsel %vm951, %v948, %v950
        %v954 = vlaneseq
        %vm955 = vcmp.ge.s32.totalorder %v954, 0
        %vm956 = vcmp.lt.s32.totalorder %v954, 512
        %vm957 = vmand %vm955, %vm956
        %958 = vst.msk [vmem:[%s243] sm:$0xf] %vm957, %v952
        %s959 = sand.u32 %s154, 1
        %s960 = scalar_lea.sflag [#allocation4], %s959
        %s961 = sand.u32 %s154, 1
        %s962 = smul.addr %s961, 4
        %s963 = scalar_lea.vmem [#allocation3], %s962
        // Predicated region
        $region41: #{tpu_custom_call.1} parent=39 // pred_check
          %p964 = pneg %p164
        $region42: #{tpu_custom_call.1} parent=39 // pred_check_branch
          %966 = sbr.rel (%p964) target = $region44
        $region43: #{tpu_custom_call.1} parent=39 // pred_region
          %s967 = smul.u32 4, %s25
          %969 = vsyncadd %s960, 0
          %s970 = smul.addr %s24, 8
          %s971 = sadd.s32 %s967, %s970
          %s972 = scalar_lea.hbm %s5, %s971
          %s974 = sshll.u32 %s963, 4
          %s975 = int_to_ptr.vmem [resolvable:$true] %s974
          %s976 = sshll.u32 %s972, 4
          %s977 = int_to_ptr.hbm [resolvable:$true] %s976
          %979 = dma.vmem_to_hbm [thread:$0]  %s975, 64, %s977, %s960
        $region44: #{tpu_custom_call.1} parent=39 // pred_fallthru
          _
      $region40: #{tpu_custom_call.1} parent=5 // pred_fallthru
        _
      %p980 = scmp.le.s32.totalorder 2, %s15
      // Predicated region
      $region45: #{tpu_custom_call.1} parent=5 // pred_check
        %p981 = pneg %p980
      $region46: #{tpu_custom_call.1} parent=5 // pred_check_branch
        %983 = sbr.rel (%p981) target = $region48
      $region47: #{tpu_custom_call.1} parent=5 // pred_region
        %s984 = ssub.s32 %s15, 2
        // Predicated region
        $region49: #{tpu_custom_call.1} parent=47 // pred_check
          %p985 = pneg %p170
        $region50: #{tpu_custom_call.1} parent=47 // pred_check_branch
          %987 = sbr.rel (%p985) target = $region52
        $region51: #{tpu_custom_call.1} parent=47 // pred_region
          %s988 = sand.u32 %s155, 1
          %s989 = scalar_lea.sflag [#allocation4], %s988
          %s990 = sand.u32 %s155, 1
          %s991 = smul.addr %s990, 4
          %s992 = scalar_lea.vmem [#allocation3], %s991
          %994 = dma.done %s989, 64
        $region52: #{tpu_custom_call.1} parent=47 // pred_fallthru
          _
      $region48: #{tpu_custom_call.1} parent=5 // pred_fallthru
        _
    $region6: #{tpu_custom_call.1} parent=1 // loop_footer
      %s19 = sadd.s32 1, %s15
    $region7: #{tpu_custom_call.1} parent=1 // loop_footer_branch
      %14 = sbr.rel target = $region3
    $region8: #{tpu_custom_call.1} parent=1 // loop_exit
      _
    %995 = vsyncpa [#allocation4], 1
    %s996 = scalar_lea.sflag [#allocation4], 1
    %997 = vsyncpa %s996, 1

</llo_original>
